<compile_context>
chip_gen: v7x
topology: tpu7x:2x2x1
jax: 0.10.0
libtpu: 0.0.40
codegen_flags: <defaults>
</compile_context>

<pallas_src>
import jax
import jax.numpy as jnp
from jax.experimental import pallas as pl
from jax.experimental.pallas import tpu as pltpu


def _specaug_kernel(bounds_ref, mel_ref, out_ref):
    # bounds_ref: int32[4] in SMEM = [t_start, t_end, f_start, f_end]
    # mel_ref/out_ref: (B_blk, F, T_tile) VMEM tiles
    t0 = bounds_ref[0]
    t1 = bounds_ref[1]
    f0 = bounds_ref[2]
    f1 = bounds_ref[3]

    _, F, T_tile = mel_ref.shape
    t_off = pl.program_id(1) * T_tile  # global time offset of this tile

    # Small iotas; jnp.where broadcasts the (1, F, T_tile) mask over the batch
    # block -- no full-shape int32 temporaries.
    time_idx = jax.lax.broadcasted_iota(jnp.int32, (1, 1, T_tile), 2) + t_off
    freq_idx = jax.lax.broadcasted_iota(jnp.int32, (1, F, 1), 1)

    time_masked = (time_idx >= t0) & (time_idx < t1)   # (1, 1, T_tile)
    freq_masked = (freq_idx >= f0) & (freq_idx < f1)   # (1, F, 1)
    masked = time_masked | freq_masked                 # (1, F, T_tile)

    x = mel_ref[...]
    out_ref[...] = jnp.where(masked, jnp.zeros((), x.dtype), x)


def _vmem_capacity_bytes():
    """Physical VMEM per TensorCore, with a conservative fallback."""
    try:
        info = pltpu.get_tpu_info()
        cap = getattr(info, "vmem_capacity_bytes", None)
        if cap:
            return int(cap)
    except Exception:
        pass
    return 64 * 1024 * 1024  # v7x per-TC value; safe lower bound for sizing


def time_freq_mask(mel, bounds, *, target_block_bytes=None):
    """Apply the (shared) time + frequency mask to mel of shape (B, F, T).

    bounds: int32[4] = [t_start, t_end, f_start, f_end].
    """
    B, F, T = mel.shape
    itemsize = jnp.dtype(mel.dtype).itemsize

    vmem_cap = _vmem_capacity_bytes()
    if target_block_bytes is None:
        # Double-buffered in+out is ~4x one block; keep that well inside VMEM.
        #   128 MiB VMEM (v5e/v6e) -> 8 MiB blocks;  64 MiB (v7x) -> 4 MiB.
        target_block_bytes = max(2 << 20, min(8 << 20, vmem_cap // 16))

    # ---- time tile: largest lane-dense tile under the budget, never > T ----
    bytes_per_time_col = max(1, F * itemsize)
    max_t_tile = max(128, (target_block_bytes // bytes_per_time_col) // 128 * 128)
    if T <= 128:
        T_tile = T                       # full dim: no 128-alignment required
    else:
        T_tile = min(max_t_tile, (T // 128) * 128)

    # ---- batch block: grow until the block-byte budget is reached ----------
    block_bytes_one_b = F * T_tile * itemsize
    B_blk = max(1, min(B, target_block_bytes // max(1, block_bytes_one_b)))

    # ---- make sure v7x's two TensorCores both get work on small inputs -----
    if pl.cdiv(B, B_blk) * pl.cdiv(T, T_tile) < 2:
        if B >= 2:
            B_blk = pl.cdiv(B, 2)
        elif T > 128:
            T_tile = max(128, pl.cdiv(pl.cdiv(T, 2), 128) * 128)

    grid = (pl.cdiv(B, B_blk), pl.cdiv(T, T_tile))

    # VMEM budget: double-buffered in + out (~4x block) plus slack, clamped so
    # it always fits the chip (v7x has only 64 MiB physical per TC).
    block_bytes = B_blk * F * T_tile * itemsize
    vmem_limit = 4 * block_bytes + (4 << 20)
    vmem_limit = max(16 << 20, min(vmem_limit, vmem_cap // 2))

    return pl.pallas_call(
        _specaug_kernel,
        out_shape=jax.ShapeDtypeStruct((B, F, T), mel.dtype),
        grid_spec=pltpu.PrefetchScalarGridSpec(
            num_scalar_prefetch=1,
            grid=grid,
            in_specs=[pl.BlockSpec((B_blk, F, T_tile),
                                   lambda b, t, bounds: (b, 0, t))],
            out_specs=pl.BlockSpec((B_blk, F, T_tile),
                                   lambda b, t, bounds: (b, 0, t)),
        ),
        compiler_params=pltpu.CompilerParams(
            dimension_semantics=("parallel", "parallel"),
            vmem_limit_bytes=int(vmem_limit)),
    )(bounds, mel)


def sample_mask_bounds(key, F, T, time_mask_param=80, freq_mask_param=27):
    """Reproduce torchaudio's mask_along_axis sampling (deterministic given key)."""
    k_t1, k_t2, k_f1, k_f2 = jax.random.split(key, 4)

    # time mask (axis = -1, size T); clamp so param > axis size cannot invert
    t_val = jnp.minimum(jax.random.uniform(k_t1, ()) * time_mask_param, T)
    t_min = jax.random.uniform(k_t2, ()) * (T - t_val)
    t_start = jnp.int32(jnp.floor(t_min))
    t_end = t_start + jnp.int32(jnp.floor(t_val))

    # frequency mask (axis = -2, size F)
    f_val = jnp.minimum(jax.random.uniform(k_f1, ()) * freq_mask_param, F)
    f_min = jax.random.uniform(k_f2, ()) * (F - f_val)
    f_start = jnp.int32(jnp.floor(f_min))
    f_end = f_start + jnp.int32(jnp.floor(f_val))

    return jnp.stack([t_start, t_end, f_start, f_end]).astype(jnp.int32)


if __name__ == "__main__":
    key = jax.random.PRNGKey(0)
    k_data, k_mask = jax.random.split(key)

    # Small log-mel spectrogram batch: (batch, mel bins, time frames).
    # T=200 deliberately not a multiple of 128 to exercise the ragged
    # boundary-block path (no pad/slice in the wrapper any more).
    B, F, T = 2, 32, 200
    mel = jax.random.normal(k_data, (B, F, T), dtype=jnp.float32)

    bounds = sample_mask_bounds(k_mask, F, T,
                                time_mask_param=80, freq_mask_param=27)

    out = time_freq_mask(mel, bounds)
    out = jax.block_until_ready(out)

    # Sanity check against a pure-JAX reference.
    t0, t1, f0, f1 = [int(v) for v in jax.device_get(bounds)]
    tidx = jnp.arange(T)[None, None, :]
    fidx = jnp.arange(F)[None, :, None]
    keep = ~(((tidx >= t0) & (tidx < t1)) | ((fidx >= f0) & (fidx < f1)))
    ref = jnp.where(keep, mel, 0.0)
    assert out.shape == mel.shape
    assert jnp.allclose(out, ref), "mismatch vs reference"

    print("KERNEL_OK")
</pallas_src>

<mosaic_0001>
module attributes {stable_mosaic.version = 11 : i64} {
  func.func @_specaug_kernel(%arg0: i32, %arg1: i32, %arg2: memref<4xi32, #tpu.memory_space<smem>>, %arg3: memref<2x32x128xf32, #tpu.memory_space<vmem>>, %arg4: memref<2x32x128xf32, #tpu.memory_space<vmem>>) attributes {dimension_semantics = [#tpu.dimension_semantics<parallel>, #tpu.dimension_semantics<parallel>], iteration_bounds = array<i64: 1, 2>, scalar_prefetch = 1 : i64, scratch_operands = 0 : i64, tpu.core_type = #tpu.core_type<tc>, window_params = [{transform_indices = @transform_0, window_bounds = array<i64: 2, 32, 128>}, {transform_indices = @transform_1, window_bounds = array<i64: 2, 32, 128>}]} {
    %c0 = arith.constant 0 : index
    %0 = memref.load %arg2[%c0] : memref<4xi32, #tpu.memory_space<smem>>
    %c1 = arith.constant 1 : index
    %1 = memref.load %arg2[%c1] : memref<4xi32, #tpu.memory_space<smem>>
    %c2 = arith.constant 2 : index
    %2 = memref.load %arg2[%c2] : memref<4xi32, #tpu.memory_space<smem>>
    %c3 = arith.constant 3 : index
    %3 = memref.load %arg2[%c3] : memref<4xi32, #tpu.memory_space<smem>>
    %c128_i32 = arith.constant 128 : i32
    %4 = arith.muli %arg1, %c128_i32 : i32
    %5 = tpu.iota {dimensions = array<i32: 2>} : vector<1x1x128xi32>
    %6 = vector.broadcast %4 : i32 to vector<1x1x128xi32>
    %7 = arith.addi %5, %6 : vector<1x1x128xi32>
    %8 = tpu.iota {dimensions = array<i32: 1>} : vector<1x32x1xi32>
    %9 = vector.broadcast %0 : i32 to vector<1x1x128xi32>
    %10 = arith.cmpi sge, %7, %9 : vector<1x1x128xi32>
    %11 = vector.broadcast %1 : i32 to vector<1x1x128xi32>
    %12 = arith.cmpi slt, %7, %11 : vector<1x1x128xi32>
    %13 = arith.andi %10, %12 : vector<1x1x128xi1>
    %14 = vector.broadcast %2 : i32 to vector<1x32x1xi32>
    %15 = arith.cmpi sge, %8, %14 : vector<1x32x1xi32>
    %16 = vector.broadcast %3 : i32 to vector<1x32x1xi32>
    %17 = arith.cmpi slt, %8, %16 : vector<1x32x1xi32>
    %18 = arith.andi %15, %17 : vector<1x32x1xi1>
    %19 = vector.broadcast %13 : vector<1x1x128xi1> to vector<1x32x128xi1>
    %20 = vector.broadcast %18 : vector<1x32x1xi1> to vector<1x32x128xi1>
    %21 = arith.ori %19, %20 : vector<1x32x128xi1>
    %c0_0 = arith.constant 0 : index
    %c0_1 = arith.constant 0 : index
    %c0_2 = arith.constant 0 : index
    %22 = vector.load %arg3[%c0_0, %c0_1, %c0_2] : memref<2x32x128xf32, #tpu.memory_space<vmem>>, vector<2x32x128xf32>
    %cst = arith.constant 0.000000e+00 : f32
    %23 = vector.shape_cast %21 : vector<1x32x128xi1> to vector<1x32x128xi1>
    %24 = vector.broadcast %23 : vector<1x32x128xi1> to vector<2x32x128xi1>
    %25 = vector.broadcast %cst : f32 to vector<2x32x128xf32>
    %26 = arith.select %24, %25, %22 : vector<2x32x128xi1>, vector<2x32x128xf32>
    %c0_3 = arith.constant 0 : index
    %c0_4 = arith.constant 0 : index
    %c0_5 = arith.constant 0 : index
    %27 = vector.load %arg4[%c0_3, %c0_4, %c0_5] : memref<2x32x128xf32, #tpu.memory_space<vmem>>, vector<2x32x128xf32>
    tpu.vector_store %arg4[%c0_3, %c0_4, %c0_5], %26 {strides = array<i32>} : memref<2x32x128xf32, #tpu.memory_space<vmem>>, vector<2x32x128xf32>,
    return
  }
  func.func @transform_0(%arg0: i32, %arg1: i32, %arg2: memref<4xi32, #tpu.memory_space<smem>>) -> (i32, i32, i32) {
    %c0_i32 = arith.constant 0 : i32
    %c0_i32_0 = arith.constant 0 : i32
    return %arg0, %c0_i32, %arg1 : i32, i32, i32
  }
  func.func @transform_1(%arg0: i32, %arg1: i32, %arg2: memref<4xi32, #tpu.memory_space<smem>>) -> (i32, i32, i32) {
    %c0_i32 = arith.constant 0 : i32
    %c0_i32_0 = arith.constant 0 : i32
    return %arg0, %c0_i32, %arg1 : i32, i32, i32
  }
}

</mosaic_0001>

<llo_original>
// kernel: tpu_custom_call.1
$region0: #{tpu_custom_call.1}
  #allocation0 [shape = 'u32[]', space=smem, size = 0x4, offset = 0x4, fixed_abs, tag = 'smem constant byte address 0x4 - core index']
  #allocation1 [shape = 'u32[144,128]{1,0:T(1,128)}', space=vmem, size = 0x12000, scoped, tag = 'internal scratch']
  #allocation2 [shape = 's32[1]{0}', space=sflag, size = 0x4, scoped, tag = 'scoped memory for tpu_custom_call.1']
  #allocation3 [shape = 'u8[512]{0}', space=smem, size = 0x200, scoped, tag = 'prefetched SMEM operand 0']
  %s0 = inlined_call_operand.hbm [shape: s32[4], index: 0, kind: input, shape index: {}]
  %s1 = inlined_call_operand.hbm [shape: f32[2,32,200], index: 1, kind: input, shape index: {}]
  %s2 = inlined_call_operand.hbm [shape: f32[2,32,200], index: 2, kind: output, shape index: {}]
  %s3 = sld [smem:[#allocation0]]
  $region41: #{tpu_custom_call.1} parent=0
    _
  %s5 = ssub.s32 1, %s3
  %s6 = scalar_select 0, %s5, %s3
  %8 = dma.hbm_to_smem %s0, 16, [#allocation3], [#allocation2]
  %9 = dma.done [#allocation2], 16
  %10 = sfence
  $region1: #{tpu_custom_call.1} parent=0
    #allocation4 [shape = 'u8[65536]{0}', space=vmem, size = 0x10000, scoped, tag = 'input window, operand 1']
    #allocation5 [shape = 's32[2]{0}', space=sflag, size = 0x8, scoped, tag = 'scoped memory for tpu_custom_call.1']
    #allocation6 [shape = 's32[2]{0}', space=sflag, size = 0x8, scoped, tag = 'scoped memory for tpu_custom_call.1']
    #allocation7 [shape = 'u8[65536]{0}', space=vmem, size = 0x10000, scoped, tag = 'output window, operand 0']
    %11 = vsyncpa [#allocation5], 0
    %s12 = scalar_lea.sflag [#allocation5], 1
    %13 = vsyncpa %s12, 0
    %14 = vsyncpa [#allocation6], 0
    %s15 = scalar_lea.sflag [#allocation6], 1
    %16 = vsyncpa %s15, 0
    loop: start=0, step=1, limit=4
    $region2: #{tpu_custom_call.1} parent=1 // loop_pre_header
      _
    $region3: #{tpu_custom_call.1} parent=1 // loop_header
      %s18 = sphi 0, %s22
      %p19 = scmp.ge.s32.totalorder %s18, 4
      %s25 = sphi 0, %s37
      %s26 = sphi 0, %s33
      %s27 = sphi 0, %s25
      %s28 = sphi 0, %s26
      %s29 = sphi 0, %s27
      %s30 = sphi 0, %s28
      %s42 = sphi 0, %s44
      %s45 = sphi 0, %s42
      %s46 = sphi 0, %s45
      %s62 = sphi 0, %s46
      %s70 = sphi 0, %s72
      %s73 = sphi 0, %s70
      %s74 = sphi 0, %s73
      %s90 = sphi 0, %s74
    $region4: #{tpu_custom_call.1} parent=1 // loop_header_branch
      %21 = sbr.rel (%p19) target = $region8
    $region5: #{tpu_custom_call.1} parent=1 // loop_body
      %s23 = ssub.s32 %s18, 1
      %s24 = ssub.s32 %s18, 2
      %s31 = sadd.s32 1, %s26
      %p32 = scmp.ge.s32.totalorder %s31, 2
      %s33 = scalar_select %p32, 0, %s31
      %s34 = sadd.s32 1, %s25
      %s35 = scalar_select %p32, %s34, %s25
      %p36 = scmp.ge.s32.totalorder %s35, 1
      %s37 = scalar_select %p36, 0, %s35
      %s38 = ssub.s32 %s25, %s37
      %s39 = ssub.s32 %s26, %s33
      %s40 = sor.u32 %s38, %s39
      %p41 = scmp.eq.s32.totalorder %s40, 0
      %s43 = sadd.s32 %s42, 1
      %s44 = scalar_select %p41, %s42, %s43
      %p47 = pneg %p41
      %p48 = scmp.eq.s32.totalorder %s18, 1
      %p49 = por %p47, %p48
      %p50 = scmp.ne.s32.totalorder %s42, %s45
      %p51 = scmp.eq.s32.totalorder %s18, 0
      %p52 = por %p50, %p51
      %p53 = scmp.ne.s32.totalorder %s42, %s45
      %p54 = scmp.eq.s32.totalorder %s23, 1
      %p55 = por %p53, %p54
      %p56 = scmp.ne.s32.totalorder %s45, %s46
      %p57 = scmp.eq.s32.totalorder %s23, 0
      %p58 = por %p56, %p57
      %p59 = scmp.ne.s32.totalorder %s45, %s46
      %p60 = scmp.eq.s32.totalorder %s24, 1
      %p61 = por %p59, %p60
      %p63 = scmp.ne.s32.totalorder %s46, %s62
      %p64 = scmp.eq.s32.totalorder %s24, 0
      %p65 = por %p63, %p64
      %s66 = ssub.s32 %s25, %s37
      %s67 = ssub.s32 %s26, %s33
      %s68 = sor.u32 %s66, %s67
      %p69 = scmp.eq.s32.totalorder %s68, 0
      %s71 = sadd.s32 %s70, 1
      %s72 = scalar_select %p69, %s70, %s71
      %p75 = pneg %p69
      %p76 = scmp.eq.s32.totalorder %s18, 1
      %p77 = por %p75, %p76
      %p78 = scmp.ne.s32.totalorder %s70, %s73
      %p79 = scmp.eq.s32.totalorder %s18, 0
      %p80 = por %p78, %p79
      %p81 = scmp.ne.s32.totalorder %s70, %s73
      %p82 = scmp.eq.s32.totalorder %s23, 1
      %p83 = por %p81, %p82
      %p84 = scmp.ne.s32.totalorder %s73, %s74
      %p85 = scmp.eq.s32.totalorder %s23, 0
      %p86 = por %p84, %p85
      %p87 = scmp.ne.s32.totalorder %s73, %s74
      %p88 = scmp.eq.s32.totalorder %s24, 1
      %p89 = por %p87, %p88
      %p91 = scmp.ne.s32.totalorder %s74, %s90
      %p92 = scmp.eq.s32.totalorder %s24, 0
      %p93 = por %p91, %p92
      %p94 = scmp.le.s32.totalorder 1, %s18
      %p95 = scmp.lt.s32.totalorder %s18, 3
      %p96 = pnand %p94, %p95
      %p97 = pneg %p96
      // Predicated region
      $region9: #{tpu_custom_call.1} parent=5 // pred_check
        _
      $region10: #{tpu_custom_call.1} parent=5 // pred_check_branch
        %99 = sbr.rel (%p96) target = $region12
      $region11: #{tpu_custom_call.1} parent=5 // pred_region
        %s100 = ssub.s32 %s18, 1
      $region12: #{tpu_custom_call.1} parent=5 // pred_fallthru
        _
      %p101 = scmp.lt.s32.totalorder %s18, 2
      // Predicated region
      $region13: #{tpu_custom_call.1} parent=5 // pred_check
        %p102 = pneg %p101
      $region14: #{tpu_custom_call.1} parent=5 // pred_check_branch
        %104 = sbr.rel (%p102) target = $region16
      $region15: #{tpu_custom_call.1} parent=5 // pred_region
        // Predicated region
        $region17: #{tpu_custom_call.1} parent=15 // pred_check
          %p105 = pneg %p52
        $region18: #{tpu_custom_call.1} parent=15 // pred_check_branch
          %107 = sbr.rel (%p105) target = $region20
        $region19: #{tpu_custom_call.1} parent=15 // pred_region
          %s108 = sand.u32 %s42, 1
          %s109 = scalar_lea.sflag [#allocation5], %s108
          %s110 = sand.u32 %s42, 1
          %s111 = smul.addr %s110, 64
          %s112 = scalar_lea.vmem [#allocation4], %s111
          %s113 = smul.u32 2, %s25
          %s115 = ssub.s32 1024, 1024
          %116 = vsyncadd %s109, %s115
          %s117 = smul.addr %s113, 8
          %s118 = sadd.s32 %s26, %s117
          %s119 = smul.addr %s118, 128
          %s120 = scalar_lea.hbm %s1, %s119
          %s121 = sshll.u32 %s112, 4
          %s122 = int_to_ptr.vmem [resolvable:$true] %s121
          %127 = dma.hbm_to_vmem [thread:$0]  %s120, 1024, %s122, %s109, 256, 128, 8
        $region20: #{tpu_custom_call.1} parent=15 // pred_fallthru
          _
      $region16: #{tpu_custom_call.1} parent=5 // pred_fallthru
        _
      %p128 = scmp.le.s32.totalorder 1, %s18
      %p129 = scmp.lt.s32.totalorder %s18, 3
      %p130 = pnand %p128, %p129
      %p131 = pneg %p130
      // Predicated region
      $region21: #{tpu_custom_call.1} parent=5 // pred_check
        _
      $region22: #{tpu_custom_call.1} parent=5 // pred_check_branch
        %133 = sbr.rel (%p130) target = $region24
      $region23: #{tpu_custom_call.1} parent=5 // pred_region
        %s134 = ssub.s32 %s18, 1
        %s135 = sand.u32 %s45, 1
        %s136 = scalar_lea.sflag [#allocation5], %s135
        %s137 = sand.u32 %s45, 1
        %s138 = smul.addr %s137, 64
        %s139 = scalar_lea.vmem [#allocation4], %s138
        // Predicated region
        $region25: #{tpu_custom_call.1} parent=23 // pred_check
          %p140 = pneg %p58
        $region26: #{tpu_custom_call.1} parent=23 // pred_check_branch
          %142 = sbr.rel (%p140) target = $region28
        $region27: #{tpu_custom_call.1} parent=23 // pred_region
          %143 = dma.done %s136, 1024
        $region28: #{tpu_custom_call.1} parent=23 // pred_fallthru
          _
        %s144 = sand.u32 %s45, 1
        %s145 = scalar_lea.sflag [#allocation5], %s144
        %s146 = sand.u32 %s45, 1
        %s147 = smul.addr %s146, 64
        %s148 = scalar_lea.vmem [#allocation4], %s147
        %p149 = pneg %p58
        %p150 = pneg %p55
        %p151 = pneg %p86
        %p152 = pneg %p83
        %s153 = sand.u32 %s73, 1
        %s154 = scalar_lea.sflag [#allocation6], %s153
        %s155 = sand.u32 %s73, 1
        %s156 = smul.addr %s155, 64
        %s157 = scalar_lea.vmem [#allocation7], %s156
        %s158 = smul.u32 2, %s27
        %s159 = smul.u32 2, %s27
        %s160 = sld [smem:[#allocation3]]
        %s161 = sld [smem:[#allocation3 + $0x1]]
        %s162 = sld [smem:[#allocation3 + $0x2]]
        %s163 = sld [smem:[#allocation3 + $0x3]]
        %s164 = smul.u32 %s28, 128
        %v165 = vlaneseq
        %v166 = vand.u32 %v165, 127
        %v167 = vstv %s164
        %v168 = vadd.s32 %v166, %v167
        %v169 = vlaneseq
        %v170 = vshrl.u32 %v169, 7
        %v171 = vadd.s32 %v170, 8
        %v172 = vadd.s32 %v170, 16
        %v173 = vadd.s32 %v170, 24
        %v174 = vstv %s160
        %vm175 = vcmp.ge.s32.totalorder %v168, %v174
        %v176 = vstv %s161
        %vm177 = vcmp.lt.s32.totalorder %v168, %v176
        %vm178 = vmand %vm175, %vm177
        %v179 = vstv %s162
        %vm180 = vcmp.ge.s32.totalorder %v170, %v179
        %vm181 = vcmp.ge.s32.totalorder %v171, %v179
        %vm182 = vcmp.ge.s32.totalorder %v172, %v179
        %vm183 = vcmp.ge.s32.totalorder %v173, %v179
        %v184 = vstv %s163
        %vm185 = vcmp.lt.s32.totalorder %v170, %v184
        %vm186 = vcmp.lt.s32.totalorder %v171, %v184
        %vm187 = vcmp.lt.s32.totalorder %v172, %v184
        %vm188 = vcmp.lt.s32.totalorder %v173, %v184
        %vm189 = vmand %vm180, %vm185
        %vm190 = vmand %vm181, %vm186
        %vm191 = vmand %vm182, %vm187
        %vm192 = vmand %vm183, %vm188
        %v193 = vsel %vm178, 1, 0
        %vm194 = vcmp.eq.s32.totalorder %v193, 1
        %v195 = vsel %vm189, 1, 0
        %v196 = vsel %vm190, 1, 0
        %v197 = vsel %vm191, 1, 0
        %v198 = vsel %vm192, 1, 0
        %vm199 = vcmp.eq.s32.totalorder %v195, 1
        %vm200 = vcmp.eq.s32.totalorder %v196, 1
        %vm201 = vcmp.eq.s32.totalorder %v197, 1
        %vm202 = vcmp.eq.s32.totalorder %v198, 1
        %vm203 = vmor %vm194, %vm199
        %vm204 = vmor %vm194, %vm200
        %vm205 = vmor %vm194, %vm201
        %vm206 = vmor %vm194, %vm202
        %v207 = vld [vmem:[%s139] sm:$0xff]
        %v208 = vld [vmem:[%s139 + $0x8] sm:$0xff]
        %v209 = vld [vmem:[%s139 + $0x10] sm:$0xff]
        %v210 = vld [vmem:[%s139 + $0x18] sm:$0xff]
        %v211 = vld [vmem:[%s139 + $0x20] sm:$0xff]
        %v212 = vld [vmem:[%s139 + $0x28] sm:$0xff]
        %v213 = vld [vmem:[%s139 + $0x30] sm:$0xff]
        %v214 = vld [vmem:[%s139 + $0x38] sm:$0xff]
        %v215 = vsel %vm203, 1, 0
        %v216 = vsel %vm204, 1, 0
        %v217 = vsel %vm205, 1, 0
        %v218 = vsel %vm206, 1, 0
        %vm219 = vcmp.eq.s32.totalorder %v215, 1
        %vm220 = vcmp.eq.s32.totalorder %v216, 1
        %vm221 = vcmp.eq.s32.totalorder %v217, 1
        %vm222 = vcmp.eq.s32.totalorder %v218, 1
        %v223 = vsel %vm219, 0.0, %v207
        %v224 = vsel %vm220, 0.0, %v208
        %v225 = vsel %vm221, 0.0, %v209
        %v226 = vsel %vm222, 0.0, %v210
        %v227 = vsel %vm219, 0.0, %v211
        %v228 = vsel %vm220, 0.0, %v212
        %v229 = vsel %vm221, 0.0, %v213
        %v230 = vsel %vm222, 0.0, %v214
        %231 = vst [vmem:[%s157] sm:$0xff] %v223
        %232 = vst [vmem:[%s157 + $0x8] sm:$0xff] %v224
        %233 = vst [vmem:[%s157 + $0x10] sm:$0xff] %v225
        %234 = vst [vmem:[%s157 + $0x18] sm:$0xff] %v226
        %235 = vst [vmem:[%s157 + $0x20] sm:$0xff] %v227
        %236 = vst [vmem:[%s157 + $0x28] sm:$0xff] %v228
        %237 = vst [vmem:[%s157 + $0x30] sm:$0xff] %v229
        %238 = vst [vmem:[%s157 + $0x38] sm:$0xff] %v230
        %s239 = sand.u32 %s73, 1
        %s240 = scalar_lea.sflag [#allocation6], %s239
        %s241 = sand.u32 %s73, 1
        %s242 = smul.addr %s241, 64
        %s243 = scalar_lea.vmem [#allocation7], %s242
        // Predicated region
        $region29: #{tpu_custom_call.1} parent=23 // pred_check
          %p244 = pneg %p83
        $region30: #{tpu_custom_call.1} parent=23 // pred_check_branch
          %246 = sbr.rel (%p244) target = $region32
        $region31: #{tpu_custom_call.1} parent=23 // pred_region
          %s247 = smul.u32 2, %s27
          %s249 = ssub.s32 1024, 1024
          %250 = vsyncadd %s240, %s249
          %s251 = smul.addr %s247, 8
          %s252 = sadd.s32 %s28, %s251
          %s253 = smul.addr %s252, 128
          %s254 = scalar_lea.hbm %s2, %s253
          %s255 = sshll.u32 %s243, 4
          %s256 = int_to_ptr.vmem [resolvable:$true] %s255
          %261 = dma.vmem_to_hbm [thread:$0]  %s256, 1024, %s254, %s240, 128, 256, 8
        $region32: #{tpu_custom_call.1} parent=23 // pred_fallthru
          _
      $region24: #{tpu_custom_call.1} parent=5 // pred_fallthru
        _
      %p262 = scmp.le.s32.totalorder 2, %s18
      // Predicated region
      $region33: #{tpu_custom_call.1} parent=5 // pred_check
        %p263 = pneg %p262
      $region34: #{tpu_custom_call.1} parent=5 // pred_check_branch
        %265 = sbr.rel (%p263) target = $region36
      $region35: #{tpu_custom_call.1} parent=5 // pred_region
        %s266 = ssub.s32 %s18, 2
        // Predicated region
        $region37: #{tpu_custom_call.1} parent=35 // pred_check
          %p267 = pneg %p89
        $region38: #{tpu_custom_call.1} parent=35 // pred_check_branch
          %269 = sbr.rel (%p267) target = $region40
        $region39: #{tpu_custom_call.1} parent=35 // pred_region
          %s270 = sand.u32 %s74, 1
          %s271 = scalar_lea.sflag [#allocation6], %s270
          %s272 = sand.u32 %s74, 1
          %s273 = smul.addr %s272, 64
          %s274 = scalar_lea.vmem [#allocation7], %s273
          %275 = dma.done %s271, 1024
        $region40: #{tpu_custom_call.1} parent=35 // pred_fallthru
          _
      $region36: #{tpu_custom_call.1} parent=5 // pred_fallthru
        _
    $region6: #{tpu_custom_call.1} parent=1 // loop_footer
      %s22 = sadd.s32 1, %s18
    $region7: #{tpu_custom_call.1} parent=1 // loop_footer_branch
      %17 = sbr.rel target = $region3
    $region8: #{tpu_custom_call.1} parent=1 // loop_exit
      _
    %276 = vsyncpa [#allocation5], 1
    %s277 = scalar_lea.sflag [#allocation5], 1
    %278 = vsyncpa %s277, 1
    %279 = vsyncpa [#allocation6], 1
    %s280 = scalar_lea.sflag [#allocation6], 1
    %281 = vsyncpa %s280, 1

</llo_original>
